<compile_context>
chip_gen: v5e
topology: v5e:2x2
jax: 0.10.0
libtpu: 0.0.40
codegen_flags: <defaults>
</compile_context>

<pallas_src>
import jax
import jax.numpy as jnp
from jax.experimental import pallas as pl
from jax.experimental.pallas import tpu as pltpu


def _identity_kernel(x_ref, o_ref):
    # Pure pass-through of the current VMEM tile.
    o_ref[...] = x_ref[...]


_LANE_CHOICES = (2048, 1024, 512, 256, 128)   # prefer wide, lane-dense blocks
_BLOCK_BYTES = 1 << 20                        # ~1 MiB per block


def _identity_impl(x: jax.Array) -> jax.Array:
    if x.size == 0:
        # Zero-element input: nothing to copy; avoid lowering a 0-sized block.
        return x

    n = x.size
    itemsize = jnp.dtype(x.dtype).itemsize
    # Sublane packing: 8 rows for 4-byte dtypes, 16 for bf16, 32 for int8.
    sublane = max(8, 32 // max(1, itemsize))

    params = pltpu.CompilerParams(dimension_semantics=("parallel",))

    # ---- preferred path: lane-dense 2D view (reshape is a free bitcast) ----
    cols = None
    for c in _LANE_CHOICES:                     # widest lane that also gives >= 1 sublane tile
        if n % c == 0 and (n // c) >= sublane:
            cols = c
            break
    if cols is None:
        for c in _LANE_CHOICES:                 # widest lane that divides n at all
            if n % c == 0:
                cols = c
                break

    if cols is not None:
        rows = n // cols
        if rows <= sublane:
            tr = rows                           # full-extent block (exempt from (8,128) rule)
        else:
            target = max(sublane, _BLOCK_BYTES // (cols * itemsize))
            tr = min(rows, (target // sublane) * sublane)
        x2d = x.reshape(rows, cols)
        y2d = pl.pallas_call(
            _identity_kernel,
            out_shape=jax.ShapeDtypeStruct((rows, cols), x.dtype),
            grid=(pl.cdiv(rows, tr),),
            in_specs=[pl.BlockSpec((tr, cols), lambda i: (i, 0))],
            out_specs=pl.BlockSpec((tr, cols), lambda i: (i, 0)),
            input_output_aliases={0: 0},
            compiler_params=params,
        )(x2d)
        return y2d.reshape(x.shape)

    # ---- fallback (total size not a multiple of 128): tile the original
    # shape directly; full-extent trailing dims are exempt from (8,128). ----
    if x.ndim >= 2:
        h, w = x.shape[-2], x.shape[-1]
        lead = n // (h * w)
        xv = x.reshape(lead, h, w)
        yv = pl.pallas_call(
            _identity_kernel,
            out_shape=jax.ShapeDtypeStruct((lead, h, w), x.dtype),
            grid=(lead,),
            in_specs=[pl.BlockSpec((1, h, w), lambda i: (i, 0, 0))],
            out_specs=pl.BlockSpec((1, h, w), lambda i: (i, 0, 0)),
            input_output_aliases={0: 0},
            compiler_params=params,
        )(xv)
        return yv.reshape(x.shape)

    # 0-D / 1-D ragged sizes: single full-extent block (rare, small).
    xv = x.reshape(1, n)
    yv = pl.pallas_call(
        _identity_kernel,
        out_shape=jax.ShapeDtypeStruct((1, n), x.dtype),
        grid=(1,),
        in_specs=[pl.BlockSpec((1, n), lambda i: (0, 0))],
        out_specs=pl.BlockSpec((1, n), lambda i: (0, 0)),
        input_output_aliases={0: 0},
    )(xv)
    return yv.reshape(x.shape)


# jit the wrapper so the reshapes are pure bitcasts (no extra HBM passes).
identity = jax.jit(_identity_impl)


if __name__ == "__main__":
    key = jax.random.PRNGKey(0)
    x = jax.random.normal(key, (2, 4, 16, 16), dtype=jnp.float32)

    y = identity(x)
    jax.block_until_ready(y)

    assert y.shape == x.shape, (y.shape, x.shape)
    assert y.dtype == x.dtype, (y.dtype, x.dtype)
    assert bool(jnp.all(y == x)), "identity output mismatch"

    print("KERNEL_OK")
</pallas_src>

<mosaic_0001>
module attributes {stable_mosaic.version = 11 : i64} {
  func.func @_identity_kernel(%arg0: i32, %arg1: memref<8x256xf32, #tpu.memory_space<vmem>>, %arg2: memref<8x256xf32, #tpu.memory_space<vmem>>) attributes {dimension_semantics = [#tpu.dimension_semantics<parallel>], iteration_bounds = array<i64: 1>, scalar_prefetch = 0 : i64, scratch_operands = 0 : i64, tpu.core_type = #tpu.core_type<tc>, window_params = [{transform_indices = @transform_0, window_bounds = array<i64: 8, 256>}, {transform_indices = @transform_1, window_bounds = array<i64: 8, 256>}]} {
    %c0 = arith.constant 0 : index
    %c0_0 = arith.constant 0 : index
    %0 = vector.load %arg1[%c0, %c0_0] : memref<8x256xf32, #tpu.memory_space<vmem>>, vector<8x256xf32>
    %c0_1 = arith.constant 0 : index
    %c0_2 = arith.constant 0 : index
    %1 = vector.load %arg2[%c0_1, %c0_2] : memref<8x256xf32, #tpu.memory_space<vmem>>, vector<8x256xf32>
    tpu.vector_store %arg2[%c0_1, %c0_2], %0 {strides = array<i32>} : memref<8x256xf32, #tpu.memory_space<vmem>>, vector<8x256xf32>,
    return
  }
  func.func @transform_0(%arg0: i32) -> (i32, i32) {
    %c0_i32 = arith.constant 0 : i32
    %c0_i32_0 = arith.constant 0 : i32
    return %arg0, %c0_i32 : i32, i32
  }
  func.func @transform_1(%arg0: i32) -> (i32, i32) {
    %c0_i32 = arith.constant 0 : i32
    %c0_i32_0 = arith.constant 0 : i32
    return %arg0, %c0_i32 : i32, i32
  }
}

</mosaic_0001>

<llo_original>
// kernel: _identity_impl.1
$region0: #{_identity_impl.1}
  #allocation0 [shape = 'u32[]', space=smem, size = 0x4, offset = 0x4, fixed_abs, tag = 'smem constant byte address 0x4 - core index']
  #allocation1 [shape = 'u32[72,128]{1,0:T(1,128)}', space=vmem, size = 0x9000, scoped, tag = 'internal scratch']
  %s0 = inlined_call_operand.vmem [shape: f32[8,256], index: 0, kind: input, shape index: {}, may-alias: {0,1}]
  %s1 = inlined_call_operand.vmem [shape: f32[8,256], index: 1, kind: output, shape index: {}, may-alias: {0,1}]
  %s2 = sld [smem:[#allocation0]]
  $region14: #{_identity_impl.1} parent=0
    _
  %s4 = ssub.s32 1, %s2
  %s5 = scalar_select 0, %s4, %s2
  // Predicated region
  $region2: #{_identity_impl.1} parent=0 // pred_check
    _
  $region3: #{_identity_impl.1} parent=0 // pred_check_branch
    %7 = sbr.rel (0) target = $region5
  $region4: #{_identity_impl.1} parent=0 // pred_region
    _
  $region5: #{_identity_impl.1} parent=0 // pred_fallthru
    _
  %v8 = vld [vmem:[%s0] sm:$0xff]
  %v9 = vld [vmem:[%s0 + $0x8] sm:$0xff]
  %10 = vst [vmem:[%s1] sm:$0xff] %v8
  %11 = vst [vmem:[%s1 + $0x8] sm:$0xff] %v9
  // Predicated region
  $region6: #{_identity_impl.1} parent=0 // pred_check
    _
  $region7: #{_identity_impl.1} parent=0 // pred_check_branch
    %13 = sbr.rel (0) target = $region9
  $region8: #{_identity_impl.1} parent=0 // pred_region
    _
  $region9: #{_identity_impl.1} parent=0 // pred_fallthru
    _
  // Predicated region
  $region10: #{_identity_impl.1} parent=0 // pred_check
    _
  $region11: #{_identity_impl.1} parent=0 // pred_check_branch
    %15 = sbr.rel (0) target = $region13
  $region12: #{_identity_impl.1} parent=0 // pred_region
    _
  $region13: #{_identity_impl.1} parent=0 // pred_fallthru
    _

</llo_original>
